<compile_context>
chip_gen: v7x
topology: tpu7x:2x2x1
jax: 0.10.0
libtpu: 0.0.40
codegen_flags: <defaults>
</compile_context>

<pallas_src>
import functools

import jax
import jax.numpy as jnp
from jax import lax
from jax.experimental import pallas as pl
from jax.experimental.pallas import tpu as pltpu


def _vmem_limit_bytes():
    """Generation-aware VMEM limit: ~48 MiB on v7x (64 MiB physical), 64 MiB on v5e/v6e."""
    cap = 128 * 1024 * 1024
    try:
        cap = int(getattr(pltpu.get_tpu_info(), "vmem_capacity_bytes", cap))
    except Exception:
        pass
    return int(min(cap * 3 // 4, 64 * 1024 * 1024))


def _choose_rows(C, n128, in_itemsize, t_itemsize, budget_bytes):
    """Rows-of-128-lanes per spatial tile, sized by the f32 temporary footprint."""
    # Live per-step VMEM ~ double-buffered logits block (2*C slabs at the input
    # dtype) + 2 label blocks + ~(C + 6) full-tile f32 temporaries (exp slabs,
    # denom / inv, per-class p / one-hot / partial sums / mask).
    bytes_per_row = 128 * ((C + 6) * 4 + 2 * C * in_itemsize + 2 * t_itemsize)
    rows = int(budget_bytes // bytes_per_row)
    rows = max(1, min(rows, 512, n128))   # 512-lane+ tiles are near roofline; 512
                                          # rows (64K px) keeps temporaries small.
    if n128 < 8:
        return n128                       # tiny spatial extent: take the full axis
    rows = max(8, (rows // 8) * 8)        # keep (8, 128)-dense vregs
    if n128 % rows:
        # Prefer an evenly dividing tile (no masked tail block) within 2x of target.
        for d in range(rows, max(rows // 2, 8) - 1, -8):
            if n128 % d == 0:
                return d
    return rows


def _dice_stats_kernel(x_ref, t_ref, inter_ref, total_ref, *,
                       C, rows, acc_rows, nh_per_split, n128, need_mask):
    # x_ref:     (1, C, rows, 128)        logits block (lane-dense spatial tiles)
    # t_ref:     (1, rows, 128)           integer class labels
    # inter_ref: (1, 1, C, acc_rows, 128) f32 per-class intersection partials
    # total_ref: (1, 1, C, acc_rows, 128) f32 per-class (sum_p + count) partials
    h = pl.program_id(2)

    # P3 accumulator: output blocks stay VMEM-resident across the spatial axis.
    @pl.when(h == 0)
    def _init():
        inter_ref[...] = jnp.zeros_like(inter_ref)
        total_ref[...] = jnp.zeros_like(total_ref)

    fold = rows // acc_rows

    # Softmax over the class axis as elementwise VPU ops across the C dense
    # (rows, 128) slabs: no cross-sublane XLU work, no (C, T) iota temporary.
    xs = [x_ref[0, c] for c in range(C)]        # native dtype (f32 or bf16)
    m = xs[0]
    for c in range(1, C):
        m = jnp.maximum(m, xs[c])
    es = [jnp.exp((xs[c] - m).astype(jnp.float32)) for c in range(C)]
    denom = es[0]
    for c in range(1, C):
        denom = denom + es[c]
    inv = pl.reciprocal(denom, approx=True)     # EUP slot, ~2^-12 rel. error

    t = t_ref[0]
    if t.dtype != jnp.int32:
        t = t.astype(jnp.int32)                 # in-VMEM upcast for int8/uint8 labels

    if need_mask:
        # Tail block of the spatial axis: rows >= n128 hold unspecified data
        # (possibly inf/NaN).  Knock them out of both streams.
        row_id = lax.broadcasted_iota(jnp.int32, (rows, 128), 0)
        start = (pl.program_id(0) * nh_per_split + h) * rows
        valid = (start + row_id) < n128
        t = jnp.where(valid, t, C)              # pad rows never match a one-hot

    for c in range(C):
        p = es[c] * inv
        if need_mask:
            p = jnp.where(valid, p, 0.0)        # applied after the mul: NaN-safe
        hit = t == c
        inter_e = jnp.where(hit, p, 0.0)        # p * onehot
        total_e = p + jnp.where(hit, 1.0, 0.0)  # p + onehot
        if fold > 1:
            # (rows,128) -> (fold, acc_rows, 128) matches the native sublane
            # tiling, so this reduction is pure vreg-wise VPU adds (no XLU).
            inter_e = jnp.sum(inter_e.reshape(fold, acc_rows, 128), axis=0)
            total_e = jnp.sum(total_e.reshape(fold, acc_rows, 128), axis=0)
        inter_ref[0, 0, c] += inter_e
        total_ref[0, 0, c] += total_e


def dice_loss(inputs, targets, smooth=1.0, _max_rows=None):
    """inputs: (B, C, H, W) float32/bfloat16 logits; targets: (B, H, W) int labels."""
    B, C, H, W = inputs.shape
    HW = H * W

    x = inputs
    if x.dtype not in (jnp.float32, jnp.bfloat16):
        x = x.astype(jnp.float32)
    t = targets
    if t.dtype not in (jnp.int32, jnp.int8, jnp.uint8):
        t = t.astype(jnp.int32)       # fallback only; common dtypes stream as-is

    x = x.reshape(B, C, HW)
    t = t.reshape(B, HW)

    # Lane-dense spatial layout: (B, C, HW) -> (B, C, HW/128, 128).  The reshape
    # is free when HW % 128 == 0 (the common case).  Otherwise pad the flat
    # spatial axis up to the next multiple of 128: logits with zeros (uniform
    # softmax, removed exactly in the epilogue) and labels with class id C.
    pad = (-HW) % 128
    if pad:
        x = jnp.pad(x, ((0, 0), (0, 0), (0, pad)))
        t = jnp.pad(t, ((0, 0), (0, pad)), constant_values=C)
    n128 = (HW + pad) // 128
    x = x.reshape(B, C, n128, 128)
    t = t.reshape(B, n128, 128)

    vmem_limit = _vmem_limit_bytes()
    rows = _choose_rows(C, n128, jnp.dtype(x.dtype).itemsize,
                        jnp.dtype(t.dtype).itemsize, vmem_limit // 2)
    if _max_rows is not None:         # test hook (must be a multiple of 8, or n128)
        rows = max(1, min(rows, _max_rows))
    nh_total = -(-n128 // rows)
    need_mask = nh_total * rows != n128

    # v7x has 2 TensorCores: when the batch alone cannot feed both, split the
    # spatial tiles into two parallel partitions (summed in the epilogue).
    n_split = 2 if (B == 1 and nh_total >= 2 and nh_total % 2 == 0) else 1
    nh = nh_total // n_split

    acc_rows = 8 if rows % 8 == 0 else rows     # (8, 128)-dense accumulator tiles

    kernel = functools.partial(
        _dice_stats_kernel, C=C, rows=rows, acc_rows=acc_rows,
        nh_per_split=nh, n128=n128, need_mask=need_mask)

    inter_p, total_p = pl.pallas_call(
        kernel,
        out_shape=(
            jax.ShapeDtypeStruct((n_split, B, C, acc_rows, 128), jnp.float32),
            jax.ShapeDtypeStruct((n_split, B, C, acc_rows, 128), jnp.float32),
        ),
        grid_spec=pltpu.PrefetchScalarGridSpec(
            num_scalar_prefetch=0,
            grid=(n_split, B, nh),              # spatial reduction axis last
            in_specs=[
                pl.BlockSpec((1, C, rows, 128),
                             lambda s, b, h: (b, 0, s * nh + h, 0)),
                pl.BlockSpec((1, rows, 128),
                             lambda s, b, h: (b, s * nh + h, 0)),
            ],
            out_specs=[
                pl.BlockSpec((1, 1, C, acc_rows, 128),
                             lambda s, b, h: (s, b, 0, 0, 0)),
                pl.BlockSpec((1, 1, C, acc_rows, 128),
                             lambda s, b, h: (s, b, 0, 0, 0)),
            ],
        ),
        compiler_params=pltpu.CompilerParams(
            dimension_semantics=("parallel", "parallel", "arbitrary"),
            vmem_limit_bytes=vmem_limit,
        ),
    )(x, t)

    # Tiny (n_split, B, C, acc_rows, 128) partials: final cross-lane reduce and
    # the dice formula stay in plain JAX.
    inter = jnp.sum(inter_p, axis=(0, 3, 4))    # (B, C)
    total = jnp.sum(total_p, axis=(0, 3, 4))    # (B, C)
    if pad:
        total = total - pad / C                 # remove uniform-softmax pad mass
    dice = (2.0 * inter + smooth) / (total + smooth)
    return 1.0 - jnp.mean(dice)


def dice_loss_ref(inputs, targets, smooth=1.0):
    """Pure-JAX reference mirroring the PyTorch module."""
    p = jax.nn.softmax(inputs.astype(jnp.float32), axis=1)
    C = inputs.shape[1]
    onehot = jax.nn.one_hot(targets, C, dtype=jnp.float32)   # (B, H, W, C)
    onehot = jnp.transpose(onehot, (0, 3, 1, 2))              # (B, C, H, W)
    inter = jnp.sum(p * onehot, axis=(2, 3))
    total = jnp.sum(p + onehot, axis=(2, 3))
    dice = (2.0 * inter + smooth) / (total + smooth)
    return 1.0 - jnp.mean(dice)


if __name__ == "__main__":
    key = jax.random.PRNGKey(0)

    def check(B, C, H, W, max_rows=None, tol=1e-3):
        k1, k2 = jax.random.split(jax.random.fold_in(key, B * 1000 + C * 100 + H + W))
        logits = jax.random.normal(k1, (B, C, H, W), dtype=jnp.float32)
        labels = jax.random.randint(k2, (B, H, W), 0, C, dtype=jnp.int32)
        out = jax.block_until_ready(dice_loss(logits, labels, smooth=1.0,
                                              _max_rows=max_rows))
        ref = jax.block_until_ready(dice_loss_ref(logits, labels, smooth=1.0))
        assert jnp.allclose(out, ref, atol=tol, rtol=tol), ((B, C, H, W), out, ref)

    # Primary small case implied by the module (B=2, C=4, 16x16 spatial).
    check(2, 4, 16, 16)
    # Uneven spatial tiling: masked tail block, multi-step accumulation, row folding.
    check(2, 4, 40, 64)
    # HW not a multiple of 128: lane pad + exact epilogue correction, C=3, B=1.
    check(1, 3, 20, 20)
    # Small-batch megacore split path (two parallel spatial partitions).
    check(1, 4, 64, 64, max_rows=8)

    print("KERNEL_OK")
</pallas_src>

<mosaic_0001>
module attributes {stable_mosaic.version = 11 : i64} {
  func.func @_dice_stats_kernel(%arg0: i32, %arg1: i32, %arg2: i32, %arg3: memref<1x4x2x128xf32, #tpu.memory_space<vmem>>, %arg4: memref<1x2x128xi32, #tpu.memory_space<vmem>>, %arg5: memref<1x1x4x2x128xf32, #tpu.memory_space<vmem>>, %arg6: memref<1x1x4x2x128xf32, #tpu.memory_space<vmem>>) attributes {dimension_semantics = [#tpu.dimension_semantics<parallel>, #tpu.dimension_semantics<parallel>, #tpu.dimension_semantics<arbitrary>], iteration_bounds = array<i64: 1, 2, 1>, scalar_prefetch = 0 : i64, scratch_operands = 0 : i64, tpu.core_type = #tpu.core_type<tc>, window_params = [{transform_indices = @transform_0, window_bounds = array<i64: 1, 4, 2, 128>}, {transform_indices = @transform_1, window_bounds = array<i64: 1, 2, 128>}, {transform_indices = @transform_2, window_bounds = array<i64: 1, 1, 4, 2, 128>}, {transform_indices = @transform_3, window_bounds = array<i64: 1, 1, 4, 2, 128>}]} {
    %c0_i32 = arith.constant 0 : i32
    %0 = arith.cmpi eq, %arg2, %c0_i32 : i32
    %1 = arith.extui %0 : i1 to i32
    %c0_i32_0 = arith.constant 0 : i32
    %2 = arith.cmpi ne, %1, %c0_i32_0 : i32
    scf.if %2 {
      %cst_108 = arith.constant 0.000000e+00 : f32
      %112 = vector.broadcast %cst_108 : f32 to vector<1x1x4x2x128xf32>
      %c0_109 = arith.constant 0 : index
      %c0_110 = arith.constant 0 : index
      %c0_111 = arith.constant 0 : index
      %c0_112 = arith.constant 0 : index
      %c0_113 = arith.constant 0 : index
      %113 = vector.load %arg5[%c0_109, %c0_110, %c0_111, %c0_112, %c0_113] : memref<1x1x4x2x128xf32, #tpu.memory_space<vmem>>, vector<1x1x4x2x128xf32>
      tpu.vector_store %arg5[%c0_109, %c0_110, %c0_111, %c0_112, %c0_113], %112 {strides = array<i32>} : memref<1x1x4x2x128xf32, #tpu.memory_space<vmem>>, vector<1x1x4x2x128xf32>,
      %cst_114 = arith.constant 0.000000e+00 : f32
      %114 = vector.broadcast %cst_114 : f32 to vector<1x1x4x2x128xf32>
      %c0_115 = arith.constant 0 : index
      %c0_116 = arith.constant 0 : index
      %c0_117 = arith.constant 0 : index
      %c0_118 = arith.constant 0 : index
      %c0_119 = arith.constant 0 : index
      %115 = vector.load %arg6[%c0_115, %c0_116, %c0_117, %c0_118, %c0_119] : memref<1x1x4x2x128xf32, #tpu.memory_space<vmem>>, vector<1x1x4x2x128xf32>
      tpu.vector_store %arg6[%c0_115, %c0_116, %c0_117, %c0_118, %c0_119], %114 {strides = array<i32>} : memref<1x1x4x2x128xf32, #tpu.memory_space<vmem>>, vector<1x1x4x2x128xf32>,
    } else {
    }
    %c0 = arith.constant 0 : index
    %c0_1 = arith.constant 0 : index
    %c0_2 = arith.constant 0 : index
    %c0_3 = arith.constant 0 : index
    %3 = vector.load %arg3[%c0, %c0_1, %c0_2, %c0_3] : memref<1x4x2x128xf32, #tpu.memory_space<vmem>>, vector<1x1x2x128xf32>
    %4 = vector.shape_cast %3 : vector<1x1x2x128xf32> to vector<2x128xf32>
    %c0_4 = arith.constant 0 : index
    %c1 = arith.constant 1 : index
    %c0_5 = arith.constant 0 : index
    %c0_6 = arith.constant 0 : index
    %5 = vector.load %arg3[%c0_4, %c1, %c0_5, %c0_6] : memref<1x4x2x128xf32, #tpu.memory_space<vmem>>, vector<1x1x2x128xf32>
    %6 = vector.shape_cast %5 : vector<1x1x2x128xf32> to vector<2x128xf32>
    %c0_7 = arith.constant 0 : index
    %c2 = arith.constant 2 : index
    %c0_8 = arith.constant 0 : index
    %c0_9 = arith.constant 0 : index
    %7 = vector.load %arg3[%c0_7, %c2, %c0_8, %c0_9] : memref<1x4x2x128xf32, #tpu.memory_space<vmem>>, vector<1x1x2x128xf32>
    %8 = vector.shape_cast %7 : vector<1x1x2x128xf32> to vector<2x128xf32>
    %c0_10 = arith.constant 0 : index
    %c3 = arith.constant 3 : index
    %c0_11 = arith.constant 0 : index
    %c0_12 = arith.constant 0 : index
    %9 = vector.load %arg3[%c0_10, %c3, %c0_11, %c0_12] : memref<1x4x2x128xf32, #tpu.memory_space<vmem>>, vector<1x1x2x128xf32>
    %10 = vector.shape_cast %9 : vector<1x1x2x128xf32> to vector<2x128xf32>
    %11 = arith.maximumf %4, %6 : vector<2x128xf32>
    %12 = arith.maximumf %11, %8 : vector<2x128xf32>
    %13 = arith.maximumf %12, %10 : vector<2x128xf32>
    %14 = arith.subf %4, %13 : vector<2x128xf32>
    %15 = math.exp %14 : vector<2x128xf32>
    %16 = arith.subf %6, %13 : vector<2x128xf32>
    %17 = math.exp %16 : vector<2x128xf32>
    %18 = arith.subf %8, %13 : vector<2x128xf32>
    %19 = math.exp %18 : vector<2x128xf32>
    %20 = arith.subf %10, %13 : vector<2x128xf32>
    %21 = math.exp %20 : vector<2x128xf32>
    %22 = arith.addf %15, %17 : vector<2x128xf32>
    %23 = arith.addf %22, %19 : vector<2x128xf32>
    %24 = arith.addf %23, %21 : vector<2x128xf32>
    %25 = tpu.reciprocal %24 {approx = true} : vector<2x128xf32> -> vector<2x128xf32>
    %c0_13 = arith.constant 0 : index
    %c0_14 = arith.constant 0 : index
    %c0_15 = arith.constant 0 : index
    %26 = vector.load %arg4[%c0_13, %c0_14, %c0_15] : memref<1x2x128xi32, #tpu.memory_space<vmem>>, vector<1x2x128xi32>
    %27 = vector.shape_cast %26 : vector<1x2x128xi32> to vector<2x128xi32>
    %28 = arith.mulf %15, %25 : vector<2x128xf32>
    %c0_i32_16 = arith.constant 0 : i32
    %29 = vector.broadcast %c0_i32_16 : i32 to vector<2x128xi32>
    %30 = arith.cmpi eq, %27, %29 : vector<2x128xi32>
    %cst = arith.constant 0.000000e+00 : f32
    %31 = vector.broadcast %cst : f32 to vector<2x128xf32>
    %32 = arith.select %30, %28, %31 : vector<2x128xi1>, vector<2x128xf32>
    %cst_17 = arith.constant 1.000000e+00 : f32
    %cst_18 = arith.constant 0.000000e+00 : f32
    %33 = vector.broadcast %cst_17 : f32 to vector<2x128xf32>
    %34 = vector.broadcast %cst_18 : f32 to vector<2x128xf32>
    %35 = arith.select %30, %33, %34 : vector<2x128xi1>, vector<2x128xf32>
    %36 = arith.addf %28, %35 : vector<2x128xf32>
    %c0_19 = arith.constant 0 : index
    %c0_20 = arith.constant 0 : index
    %c0_21 = arith.constant 0 : index
    %c0_22 = arith.constant 0 : index
    %c0_23 = arith.constant 0 : index
    %37 = vector.load %arg5[%c0_19, %c0_20, %c0_21, %c0_22, %c0_23] : memref<1x1x4x2x128xf32, #tpu.memory_space<vmem>>, vector<1x1x1x2x128xf32>
    %38 = vector.shape_cast %37 : vector<1x1x1x2x128xf32> to vector<2x128xf32>
    %39 = arith.addf %38, %32 : vector<2x128xf32>
    %c0_24 = arith.constant 0 : index
    %c0_25 = arith.constant 0 : index
    %c0_26 = arith.constant 0 : index
    %c0_27 = arith.constant 0 : index
    %c0_28 = arith.constant 0 : index
    %40 = vector.load %arg5[%c0_24, %c0_25, %c0_26, %c0_27, %c0_28] : memref<1x1x4x2x128xf32, #tpu.memory_space<vmem>>, vector<1x1x1x2x128xf32>
    %41 = vector.shape_cast %40 : vector<1x1x1x2x128xf32> to vector<2x128xf32>
    %42 = vector.shape_cast %39 : vector<2x128xf32> to vector<1x1x1x2x128xf32>
    tpu.vector_store %arg5[%c0_24, %c0_25, %c0_26, %c0_27, %c0_28], %42 {strides = array<i32>} : memref<1x1x4x2x128xf32, #tpu.memory_space<vmem>>, vector<1x1x1x2x128xf32>,
    %c0_29 = arith.constant 0 : index
    %c0_30 = arith.constant 0 : index
    %c0_31 = arith.constant 0 : index
    %c0_32 = arith.constant 0 : index
    %c0_33 = arith.constant 0 : index
    %43 = vector.load %arg6[%c0_29, %c0_30, %c0_31, %c0_32, %c0_33] : memref<1x1x4x2x128xf32, #tpu.memory_space<vmem>>, vector<1x1x1x2x128xf32>
    %44 = vector.shape_cast %43 : vector<1x1x1x2x128xf32> to vector<2x128xf32>
    %45 = arith.addf %44, %36 : vector<2x128xf32>
    %c0_34 = arith.constant 0 : index
    %c0_35 = arith.constant 0 : index
    %c0_36 = arith.constant 0 : index
    %c0_37 = arith.constant 0 : index
    %c0_38 = arith.constant 0 : index
    %46 = vector.load %arg6[%c0_34, %c0_35, %c0_36, %c0_37, %c0_38] : memref<1x1x4x2x128xf32, #tpu.memory_space<vmem>>, vector<1x1x1x2x128xf32>
    %47 = vector.shape_cast %46 : vector<1x1x1x2x128xf32> to vector<2x128xf32>
    %48 = vector.shape_cast %45 : vector<2x128xf32> to vector<1x1x1x2x128xf32>
    tpu.vector_store %arg6[%c0_34, %c0_35, %c0_36, %c0_37, %c0_38], %48 {strides = array<i32>} : memref<1x1x4x2x128xf32, #tpu.memory_space<vmem>>, vector<1x1x1x2x128xf32>,
    %49 = arith.mulf %17, %25 : vector<2x128xf32>
    %c1_i32 = arith.constant 1 : i32
    %50 = vector.broadcast %c1_i32 : i32 to vector<2x128xi32>
    %51 = arith.cmpi eq, %27, %50 : vector<2x128xi32>
    %cst_39 = arith.constant 0.000000e+00 : f32
    %52 = vector.broadcast %cst_39 : f32 to vector<2x128xf32>
    %53 = arith.select %51, %49, %52 : vector<2x128xi1>, vector<2x128xf32>
    %cst_40 = arith.constant 1.000000e+00 : f32
    %cst_41 = arith.constant 0.000000e+00 : f32
    %54 = vector.broadcast %cst_40 : f32 to vector<2x128xf32>
    %55 = vector.broadcast %cst_41 : f32 to vector<2x128xf32>
    %56 = arith.select %51, %54, %55 : vector<2x128xi1>, vector<2x128xf32>
    %57 = arith.addf %49, %56 : vector<2x128xf32>
    %c0_42 = arith.constant 0 : index
    %c0_43 = arith.constant 0 : index
    %c1_44 = arith.constant 1 : index
    %c0_45 = arith.constant 0 : index
    %c0_46 = arith.constant 0 : index
    %58 = vector.load %arg5[%c0_42, %c0_43, %c1_44, %c0_45, %c0_46] : memref<1x1x4x2x128xf32, #tpu.memory_space<vmem>>, vector<1x1x1x2x128xf32>
    %59 = vector.shape_cast %58 : vector<1x1x1x2x128xf32> to vector<2x128xf32>
    %60 = arith.addf %59, %53 : vector<2x128xf32>
    %c0_47 = arith.constant 0 : index
    %c0_48 = arith.constant 0 : index
    %c1_49 = arith.constant 1 : index
    %c0_50 = arith.constant 0 : index
    %c0_51 = arith.constant 0 : index
    %61 = vector.load %arg5[%c0_47, %c0_48, %c1_49, %c0_50, %c0_51] : memref<1x1x4x2x128xf32, #tpu.memory_space<vmem>>, vector<1x1x1x2x128xf32>
    %62 = vector.shape_cast %61 : vector<1x1x1x2x128xf32> to vector<2x128xf32>
    %63 = vector.shape_cast %60 : vector<2x128xf32> to vector<1x1x1x2x128xf32>
    tpu.vector_store %arg5[%c0_47, %c0_48, %c1_49, %c0_50, %c0_51], %63 {strides = array<i32>} : memref<1x1x4x2x128xf32, #tpu.memory_space<vmem>>, vector<1x1x1x2x128xf32>,
    %c0_52 = arith.constant 0 : index
    %c0_53 = arith.constant 0 : index
    %c1_54 = arith.constant 1 : index
    %c0_55 = arith.constant 0 : index
    %c0_56 = arith.constant 0 : index
    %64 = vector.load %arg6[%c0_52, %c0_53, %c1_54, %c0_55, %c0_56] : memref<1x1x4x2x128xf32, #tpu.memory_space<vmem>>, vector<1x1x1x2x128xf32>
    %65 = vector.shape_cast %64 : vector<1x1x1x2x128xf32> to vector<2x128xf32>
    %66 = arith.addf %65, %57 : vector<2x128xf32>
    %c0_57 = arith.constant 0 : index
    %c0_58 = arith.constant 0 : index
    %c1_59 = arith.constant 1 : index
    %c0_60 = arith.constant 0 : index
    %c0_61 = arith.constant 0 : index
    %67 = vector.load %arg6[%c0_57, %c0_58, %c1_59, %c0_60, %c0_61] : memref<1x1x4x2x128xf32, #tpu.memory_space<vmem>>, vector<1x1x1x2x128xf32>
    %68 = vector.shape_cast %67 : vector<1x1x1x2x128xf32> to vector<2x128xf32>
    %69 = vector.shape_cast %66 : vector<2x128xf32> to vector<1x1x1x2x128xf32>
    tpu.vector_store %arg6[%c0_57, %c0_58, %c1_59, %c0_60, %c0_61], %69 {strides = array<i32>} : memref<1x1x4x2x128xf32, #tpu.memory_space<vmem>>, vector<1x1x1x2x128xf32>,
    %70 = arith.mulf %19, %25 : vector<2x128xf32>
    %c2_i32 = arith.constant 2 : i32
    %71 = vector.broadcast %c2_i32 : i32 to vector<2x128xi32>
    %72 = arith.cmpi eq, %27, %71 : vector<2x128xi32>
    %cst_62 = arith.constant 0.000000e+00 : f32
    %73 = vector.broadcast %cst_62 : f32 to vector<2x128xf32>
    %74 = arith.select %72, %70, %73 : vector<2x128xi1>, vector<2x128xf32>
    %cst_63 = arith.constant 1.000000e+00 : f32
    %cst_64 = arith.constant 0.000000e+00 : f32
    %75 = vector.broadcast %cst_63 : f32 to vector<2x128xf32>
    %76 = vector.broadcast %cst_64 : f32 to vector<2x128xf32>
    %77 = arith.select %72, %75, %76 : vector<2x128xi1>, vector<2x128xf32>
    %78 = arith.addf %70, %77 : vector<2x128xf32>
    %c0_65 = arith.constant 0 : index
    %c0_66 = arith.constant 0 : index
    %c2_67 = arith.constant 2 : index
    %c0_68 = arith.constant 0 : index
    %c0_69 = arith.constant 0 : index
    %79 = vector.load %arg5[%c0_65, %c0_66, %c2_67, %c0_68, %c0_69] : memref<1x1x4x2x128xf32, #tpu.memory_space<vmem>>, vector<1x1x1x2x128xf32>
    %80 = vector.shape_cast %79 : vector<1x1x1x2x128xf32> to vector<2x128xf32>
    %81 = arith.addf %80, %74 : vector<2x128xf32>
    %c0_70 = arith.constant 0 : index
    %c0_71 = arith.constant 0 : index
    %c2_72 = arith.constant 2 : index
    %c0_73 = arith.constant 0 : index
    %c0_74 = arith.constant 0 : index
    %82 = vector.load %arg5[%c0_70, %c0_71, %c2_72, %c0_73, %c0_74] : memref<1x1x4x2x128xf32, #tpu.memory_space<vmem>>, vector<1x1x1x2x128xf32>
    %83 = vector.shape_cast %82 : vector<1x1x1x2x128xf32> to vector<2x128xf32>
    %84 = vector.shape_cast %81 : vector<2x128xf32> to vector<1x1x1x2x128xf32>
    tpu.vector_store %arg5[%c0_70, %c0_71, %c2_72, %c0_73, %c0_74], %84 {strides = array<i32>} : memref<1x1x4x2x128xf32, #tpu.memory_space<vmem>>, vector<1x1x1x2x128xf32>,
    %c0_75 = arith.constant 0 : index
    %c0_76 = arith.constant 0 : index
    %c2_77 = arith.constant 2 : index
    %c0_78 = arith.constant 0 : index
    %c0_79 = arith.constant 0 : index
    %85 = vector.load %arg6[%c0_75, %c0_76, %c2_77, %c0_78, %c0_79] : memref<1x1x4x2x128xf32, #tpu.memory_space<vmem>>, vector<1x1x1x2x128xf32>
    %86 = vector.shape_cast %85 : vector<1x1x1x2x128xf32> to vector<2x128xf32>
    %87 = arith.addf %86, %78 : vector<2x128xf32>
    %c0_80 = arith.constant 0 : index
    %c0_81 = arith.constant 0 : index
    %c2_82 = arith.constant 2 : index
    %c0_83 = arith.constant 0 : index
    %c0_84 = arith.constant 0 : index
    %88 = vector.load %arg6[%c0_80, %c0_81, %c2_82, %c0_83, %c0_84] : memref<1x1x4x2x128xf32, #tpu.memory_space<vmem>>, vector<1x1x1x2x128xf32>
    %89 = vector.shape_cast %88 : vector<1x1x1x2x128xf32> to vector<2x128xf32>
    %90 = vector.shape_cast %87 : vector<2x128xf32> to vector<1x1x1x2x128xf32>
    tpu.vector_store %arg6[%c0_80, %c0_81, %c2_82, %c0_83, %c0_84], %90 {strides = array<i32>} : memref<1x1x4x2x128xf32, #tpu.memory_space<vmem>>, vector<1x1x1x2x128xf32>,
    %91 = arith.mulf %21, %25 : vector<2x128xf32>
    %c3_i32 = arith.constant 3 : i32
    %92 = vector.broadcast %c3_i32 : i32 to vector<2x128xi32>
    %93 = arith.cmpi eq, %27, %92 : vector<2x128xi32>
    %cst_85 = arith.constant 0.000000e+00 : f32
    %94 = vector.broadcast %cst_85 : f32 to vector<2x128xf32>
    %95 = arith.select %93, %91, %94 : vector<2x128xi1>, vector<2x128xf32>
    %cst_86 = arith.constant 1.000000e+00 : f32
    %cst_87 = arith.constant 0.000000e+00 : f32
    %96 = vector.broadcast %cst_86 : f32 to vector<2x128xf32>
    %97 = vector.broadcast %cst_87 : f32 to vector<2x128xf32>
    %98 = arith.select %93, %96, %97 : vector<2x128xi1>, vector<2x128xf32>
    %99 = arith.addf %91, %98 : vector<2x128xf32>
    %c0_88 = arith.constant 0 : index
    %c0_89 = arith.constant 0 : index
    %c3_90 = arith.constant 3 : index
    %c0_91 = arith.constant 0 : index
    %c0_92 = arith.constant 0 : index
    %100 = vector.load %arg5[%c0_88, %c0_89, %c3_90, %c0_91, %c0_92] : memref<1x1x4x2x128xf32, #tpu.memory_space<vmem>>, vector<1x1x1x2x128xf32>
    %101 = vector.shape_cast %100 : vector<1x1x1x2x128xf32> to vector<2x128xf32>
    %102 = arith.addf %101, %95 : vector<2x128xf32>
    %c0_93 = arith.constant 0 : index
    %c0_94 = arith.constant 0 : index
    %c3_95 = arith.constant 3 : index
    %c0_96 = arith.constant 0 : index
    %c0_97 = arith.constant 0 : index
    %103 = vector.load %arg5[%c0_93, %c0_94, %c3_95, %c0_96, %c0_97] : memref<1x1x4x2x128xf32, #tpu.memory_space<vmem>>, vector<1x1x1x2x128xf32>
    %104 = vector.shape_cast %103 : vector<1x1x1x2x128xf32> to vector<2x128xf32>
    %105 = vector.shape_cast %102 : vector<2x128xf32> to vector<1x1x1x2x128xf32>
    tpu.vector_store %arg5[%c0_93, %c0_94, %c3_95, %c0_96, %c0_97], %105 {strides = array<i32>} : memref<1x1x4x2x128xf32, #tpu.memory_space<vmem>>, vector<1x1x1x2x128xf32>,
    %c0_98 = arith.constant 0 : index
    %c0_99 = arith.constant 0 : index
    %c3_100 = arith.constant 3 : index
    %c0_101 = arith.constant 0 : index
    %c0_102 = arith.constant 0 : index
    %106 = vector.load %arg6[%c0_98, %c0_99, %c3_100, %c0_101, %c0_102] : memref<1x1x4x2x128xf32, #tpu.memory_space<vmem>>, vector<1x1x1x2x128xf32>
    %107 = vector.shape_cast %106 : vector<1x1x1x2x128xf32> to vector<2x128xf32>
    %108 = arith.addf %107, %99 : vector<2x128xf32>
    %c0_103 = arith.constant 0 : index
    %c0_104 = arith.constant 0 : index
    %c3_105 = arith.constant 3 : index
    %c0_106 = arith.constant 0 : index
    %c0_107 = arith.constant 0 : index
    %109 = vector.load %arg6[%c0_103, %c0_104, %c3_105, %c0_106, %c0_107] : memref<1x1x4x2x128xf32, #tpu.memory_space<vmem>>, vector<1x1x1x2x128xf32>
    %110 = vector.shape_cast %109 : vector<1x1x1x2x128xf32> to vector<2x128xf32>
    %111 = vector.shape_cast %108 : vector<2x128xf32> to vector<1x1x1x2x128xf32>
    tpu.vector_store %arg6[%c0_103, %c0_104, %c3_105, %c0_106, %c0_107], %111 {strides = array<i32>} : memref<1x1x4x2x128xf32, #tpu.memory_space<vmem>>, vector<1x1x1x2x128xf32>,
    return
  }
  func.func @transform_0(%arg0: i32, %arg1: i32, %arg2: i32) -> (i32, i32, i32, i32) {
    %c1_i32 = arith.constant 1 : i32
    %0 = arith.muli %arg0, %c1_i32 : i32
    %1 = arith.addi %0, %arg2 : i32
    %c0_i32 = arith.constant 0 : i32
    %c0_i32_0 = arith.constant 0 : i32
    %c0_i32_1 = arith.constant 0 : i32
    return %arg1, %c0_i32, %1, %c0_i32_0 : i32, i32, i32, i32
  }
  func.func @transform_1(%arg0: i32, %arg1: i32, %arg2: i32) -> (i32, i32, i32) {
    %c1_i32 = arith.constant 1 : i32
    %0 = arith.muli %arg0, %c1_i32 : i32
    %1 = arith.addi %0, %arg2 : i32
    %c0_i32 = arith.constant 0 : i32
    %c0_i32_0 = arith.constant 0 : i32
    return %arg1, %1, %c0_i32 : i32, i32, i32
  }
  func.func @transform_2(%arg0: i32, %arg1: i32, %arg2: i32) -> (i32, i32, i32, i32, i32) {
    %c0_i32 = arith.constant 0 : i32
    %c0_i32_0 = arith.constant 0 : i32
    %c0_i32_1 = arith.constant 0 : i32
    %c0_i32_2 = arith.constant 0 : i32
    return %arg0, %arg1, %c0_i32, %c0_i32_0, %c0_i32_1 : i32, i32, i32, i32, i32
  }
  func.func @transform_3(%arg0: i32, %arg1: i32, %arg2: i32) -> (i32, i32, i32, i32, i32) {
    %c0_i32 = arith.constant 0 : i32
    %c0_i32_0 = arith.constant 0 : i32
    %c0_i32_1 = arith.constant 0 : i32
    %c0_i32_2 = arith.constant 0 : i32
    return %arg0, %arg1, %c0_i32, %c0_i32_0, %c0_i32_1 : i32, i32, i32, i32, i32
  }
}

</mosaic_0001>

<llo_original>
// kernel: tpu_custom_call.1
$region0: #{tpu_custom_call.1}
  #allocation0 [shape = 'u32[]', space=smem, size = 0x4, offset = 0x4, fixed_abs, tag = 'smem constant byte address 0x4 - core index']
  #allocation1 [shape = 'u32[144,128]{1,0:T(1,128)}', space=vmem, size = 0x12000, scoped, tag = 'internal scratch']
  %s0 = inlined_call_operand.hbm [shape: f32[2,4,2,128], index: 0, kind: input, shape index: {}]
  %s1 = inlined_call_operand.hbm [shape: s32[2,2,128], index: 1, kind: input, shape index: {}]
  %s2 = inlined_call_operand.hbm [shape: f32[1,2,4,2,128], index: 2, kind: output, shape index: {0}]
  %s3 = inlined_call_operand.hbm [shape: f32[1,2,4,2,128], index: 3, kind: output, shape index: {1}]
  %4 = xla_tuple %s2, %s3
  %s5 = sld [smem:[#allocation0]]
  $region61: #{tpu_custom_call.1} parent=0
    _
  %s7 = ssub.s32 1, %s5
  %s8 = scalar_select 0, %s7, %s5
  $region1: #{tpu_custom_call.1} parent=0
    #allocation2 [shape = 'u8[8192]{0}', space=vmem, size = 0x2000, scoped, tag = 'input window, operand 0']
    #allocation3 [shape = 's32[2]{0}', space=sflag, size = 0x8, scoped, tag = 'scoped memory for tpu_custom_call.1']
    #allocation4 [shape = 's32[2]{0}', space=sflag, size = 0x8, scoped, tag = 'scoped memory for tpu_custom_call.1']
    #allocation5 [shape = 'u8[2048]{0}', space=vmem, size = 0x800, scoped, tag = 'input window, operand 1']
    #allocation6 [shape = 's32[2]{0}', space=sflag, size = 0x8, scoped, tag = 'scoped memory for tpu_custom_call.1']
    #allocation7 [shape = 'u8[8192]{0}', space=vmem, size = 0x2000, scoped, tag = 'output window, operand 0']
    #allocation8 [shape = 'u8[8192]{0}', space=vmem, size = 0x2000, scoped, tag = 'output window, operand 1']
    #allocation9 [shape = 's32[2]{0}', space=sflag, size = 0x8, scoped, tag = 'scoped memory for tpu_custom_call.1']
    %9 = vsyncpa [#allocation3], 0
    %s10 = scalar_lea.sflag [#allocation3], 1
    %11 = vsyncpa %s10, 0
    %12 = vsyncpa [#allocation6], 0
    %s13 = scalar_lea.sflag [#allocation6], 1
    %14 = vsyncpa %s13, 0
    %15 = vsyncpa [#allocation4], 0
    %s16 = scalar_lea.sflag [#allocation4], 1
    %17 = vsyncpa %s16, 0
    %18 = vsyncpa [#allocation9], 0
    %s19 = scalar_lea.sflag [#allocation9], 1
    %20 = vsyncpa %s19, 0
    loop: start=0, step=1, limit=4
    $region2: #{tpu_custom_call.1} parent=1 // loop_pre_header
      _
    $region3: #{tpu_custom_call.1} parent=1 // loop_header
      %s22 = sphi 0, %s26
      %p23 = scmp.ge.s32.totalorder %s22, 4
      %s29 = sphi 0, %s48
      %s30 = sphi 0, %s44
      %s31 = sphi 0, %s40
      %s32 = sphi 0, %s29
      %s33 = sphi 0, %s30
      %s34 = sphi 0, %s31
      %s35 = sphi 0, %s32
      %s36 = sphi 0, %s33
      %s37 = sphi 0, %s34
      %s55 = sphi 0, %s57
      %s58 = sphi 0, %s55
      %s59 = sphi 0, %s58
      %s75 = sphi 0, %s59
      %s85 = sphi 0, %s87
      %s88 = sphi 0, %s85
      %s89 = sphi 0, %s88
      %s105 = sphi 0, %s89
      %s113 = sphi 0, %s115
      %s116 = sphi 0, %s113
      %s117 = sphi 0, %s116
      %s133 = sphi 0, %s117
      %s141 = sphi 0, %s143
      %s144 = sphi 0, %s141
      %s145 = sphi 0, %s144
      %s161 = sphi 0, %s145
    $region4: #{tpu_custom_call.1} parent=1 // loop_header_branch
      %25 = sbr.rel (%p23) target = $region8
    $region5: #{tpu_custom_call.1} parent=1 // loop_body
      %s27 = ssub.s32 %s22, 1
      %s28 = ssub.s32 %s22, 2
      %s38 = sadd.s32 1, %s31
      %p39 = scmp.ge.s32.totalorder %s38, 1
      %s40 = scalar_select %p39, 0, %s38
      %s41 = sadd.s32 1, %s30
      %s42 = scalar_select %p39, %s41, %s30
      %p43 = scmp.ge.s32.totalorder %s42, 2
      %s44 = scalar_select %p43, 0, %s42
      %s45 = sadd.s32 1, %s29
      %s46 = scalar_select %p43, %s45, %s29
      %p47 = scmp.ge.s32.totalorder %s46, 1
      %s48 = scalar_select %p47, 0, %s46
      %s49 = sadd.s32 %s29, %s31
      %s50 = sadd.s32 %s48, %s40
      %s51 = ssub.s32 %s30, %s44
      %s52 = ssub.s32 %s49, %s50
      %s53 = sor.u32 %s51, %s52
      %p54 = scmp.eq.s32.totalorder %s53, 0
      %s56 = sadd.s32 %s55, 1
      %s57 = scalar_select %p54, %s55, %s56
      %p60 = pneg %p54
      %p61 = scmp.eq.s32.totalorder %s22, 1
      %p62 = por %p60, %p61
      %p63 = scmp.ne.s32.totalorder %s55, %s58
      %p64 = scmp.eq.s32.totalorder %s22, 0
      %p65 = por %p63, %p64
      %p66 = scmp.ne.s32.totalorder %s55, %s58
      %p67 = scmp.eq.s32.totalorder %s27, 1
      %p68 = por %p66, %p67
      %p69 = scmp.ne.s32.totalorder %s58, %s59
      %p70 = scmp.eq.s32.totalorder %s27, 0
      %p71 = por %p69, %p70
      %p72 = scmp.ne.s32.totalorder %s58, %s59
      %p73 = scmp.eq.s32.totalorder %s28, 1
      %p74 = por %p72, %p73
      %p76 = scmp.ne.s32.totalorder %s59, %s75
      %p77 = scmp.eq.s32.totalorder %s28, 0
      %p78 = por %p76, %p77
      %s79 = sadd.s32 %s29, %s31
      %s80 = sadd.s32 %s48, %s40
      %s81 = ssub.s32 %s30, %s44
      %s82 = ssub.s32 %s79, %s80
      %s83 = sor.u32 %s81, %s82
      %p84 = scmp.eq.s32.totalorder %s83, 0
      %s86 = sadd.s32 %s85, 1
      %s87 = scalar_select %p84, %s85, %s86
      %p90 = pneg %p84
      %p91 = scmp.eq.s32.totalorder %s22, 1
      %p92 = por %p90, %p91
      %p93 = scmp.ne.s32.totalorder %s85, %s88
      %p94 = scmp.eq.s32.totalorder %s22, 0
      %p95 = por %p93, %p94
      %p96 = scmp.ne.s32.totalorder %s85, %s88
      %p97 = scmp.eq.s32.totalorder %s27, 1
      %p98 = por %p96, %p97
      %p99 = scmp.ne.s32.totalorder %s88, %s89
      %p100 = scmp.eq.s32.totalorder %s27, 0
      %p101 = por %p99, %p100
      %p102 = scmp.ne.s32.totalorder %s88, %s89
      %p103 = scmp.eq.s32.totalorder %s28, 1
      %p104 = por %p102, %p103
      %p106 = scmp.ne.s32.totalorder %s89, %s105
      %p107 = scmp.eq.s32.totalorder %s28, 0
      %p108 = por %p106, %p107
      %s109 = ssub.s32 %s29, %s48
      %s110 = ssub.s32 %s30, %s44
      %s111 = sor.u32 %s109, %s110
      %p112 = scmp.eq.s32.totalorder %s111, 0
      %s114 = sadd.s32 %s113, 1
      %s115 = scalar_select %p112, %s113, %s114
      %p118 = pneg %p112
      %p119 = scmp.eq.s32.totalorder %s22, 1
      %p120 = por %p118, %p119
      %p121 = scmp.ne.s32.totalorder %s113, %s116
      %p122 = scmp.eq.s32.totalorder %s22, 0
      %p123 = por %p121, %p122
      %p124 = scmp.ne.s32.totalorder %s113, %s116
      %p125 = scmp.eq.s32.totalorder %s27, 1
      %p126 = por %p124, %p125
      %p127 = scmp.ne.s32.totalorder %s116, %s117
      %p128 = scmp.eq.s32.totalorder %s27, 0
      %p129 = por %p127, %p128
      %p130 = scmp.ne.s32.totalorder %s116, %s117
      %p131 = scmp.eq.s32.totalorder %s28, 1
      %p132 = por %p130, %p131
      %p134 = scmp.ne.s32.totalorder %s117, %s133
      %p135 = scmp.eq.s32.totalorder %s28, 0
      %p136 = por %p134, %p135
      %s137 = ssub.s32 %s29, %s48
      %s138 = ssub.s32 %s30, %s44
      %s139 = sor.u32 %s137, %s138
      %p140 = scmp.eq.s32.totalorder %s139, 0
      %s142 = sadd.s32 %s141, 1
      %s143 = scalar_select %p140, %s141, %s142
      %p146 = pneg %p140
      %p147 = scmp.eq.s32.totalorder %s22, 1
      %p148 = por %p146, %p147
      %p149 = scmp.ne.s32.totalorder %s141, %s144
      %p150 = scmp.eq.s32.totalorder %s22, 0
      %p151 = por %p149, %p150
      %p152 = scmp.ne.s32.totalorder %s141, %s144
      %p153 = scmp.eq.s32.totalorder %s27, 1
      %p154 = por %p152, %p153
      %p155 = scmp.ne.s32.totalorder %s144, %s145
      %p156 = scmp.eq.s32.totalorder %s27, 0
      %p157 = por %p155, %p156
      %p158 = scmp.ne.s32.totalorder %s144, %s145
      %p159 = scmp.eq.s32.totalorder %s28, 1
      %p160 = por %p158, %p159
      %p162 = scmp.ne.s32.totalorder %s145, %s161
      %p163 = scmp.eq.s32.totalorder %s28, 0
      %p164 = por %p162, %p163
      %p165 = scmp.le.s32.totalorder 1, %s22
      %p166 = scmp.lt.s32.totalorder %s22, 3
      %p167 = pnand %p165, %p166
      %p168 = pneg %p167
      // Predicated region
      $region9: #{tpu_custom_call.1} parent=5 // pred_check
        _
      $region10: #{tpu_custom_call.1} parent=5 // pred_check_branch
        %170 = sbr.rel (%p167) target = $region12
      $region11: #{tpu_custom_call.1} parent=5 // pred_region
        %s171 = ssub.s32 %s22, 1
      $region12: #{tpu_custom_call.1} parent=5 // pred_fallthru
        _
      %p172 = scmp.lt.s32.totalorder %s22, 2
      // Predicated region
      $region13: #{tpu_custom_call.1} parent=5 // pred_check
        %p173 = pneg %p172
      $region14: #{tpu_custom_call.1} parent=5 // pred_check_branch
        %175 = sbr.rel (%p173) target = $region16
      $region15: #{tpu_custom_call.1} parent=5 // pred_region
        // Predicated region
        $region17: #{tpu_custom_call.1} parent=15 // pred_check
          %p176 = pneg %p65
        $region18: #{tpu_custom_call.1} parent=15 // pred_check_branch
          %178 = sbr.rel (%p176) target = $region20
        $region19: #{tpu_custom_call.1} parent=15 // pred_region
          %s179 = sand.u32 %s55, 1
          %s180 = scalar_lea.sflag [#allocation3], %s179
          %s181 = sand.u32 %s55, 1
          %s182 = smul.addr %s181, 8
          %s183 = scalar_lea.vmem [#allocation2], %s182
          %s184 = sadd.s32 %s29, %s31
          %s186 = ssub.s32 128, 128
          %187 = vsyncadd %s180, %s186
          %s188 = smul.addr %s30, 4
          %s189 = sadd.s32 %s184, %s188
          %s190 = smul.addr %s189, 32
          %s191 = scalar_lea.hbm %s0, %s190
          %s192 = sshll.u32 %s183, 4
          %s193 = int_to_ptr.vmem [resolvable:$true] %s192
          %198 = dma.hbm_to_vmem [thread:$0]  %s191, 128, %s193, %s180, 32, 32, 2
        $region20: #{tpu_custom_call.1} parent=15 // pred_fallthru
          _
        // Predicated region
        $region21: #{tpu_custom_call.1} parent=15 // pred_check
          %p199 = pneg %p95
        $region22: #{tpu_custom_call.1} parent=15 // pred_check_branch
          %201 = sbr.rel (%p199) target = $region24
        $region23: #{tpu_custom_call.1} parent=15 // pred_region
          %s202 = sand.u32 %s85, 1
          %s203 = scalar_lea.sflag [#allocation6], %s202
          %s204 = sand.u32 %s85, 1
          %s205 = smul.addr %s204, 2
          %s206 = scalar_lea.vmem [#allocation5], %s205
          %s207 = sadd.s32 %s29, %s31
          %s209 = ssub.s32 32, 32
          %210 = vsyncadd %s203, %s209
          %s211 = sadd.s32 %s207, %s30
          %s212 = smul.addr %s211, 32
          %s213 = scalar_lea.hbm %s1, %s212
          %s215 = sshll.u32 %s206, 4
          %s216 = int_to_ptr.vmem [resolvable:$true] %s215
          %218 = dma.hbm_to_vmem [thread:$0]  %s213, 32, %s216, %s203
        $region24: #{tpu_custom_call.1} parent=15 // pred_fallthru
          _
      $region16: #{tpu_custom_call.1} parent=5 // pred_fallthru
        _
      %p219 = scmp.le.s32.totalorder 1, %s22
      %p220 = scmp.lt.s32.totalorder %s22, 3
      %p221 = pnand %p219, %p220
      %p222 = pneg %p221
      // Predicated region
      $region25: #{tpu_custom_call.1} parent=5 // pred_check
        _
      $region26: #{tpu_custom_call.1} parent=5 // pred_check_branch
        %224 = sbr.rel (%p221) target = $region28
      $region27: #{tpu_custom_call.1} parent=5 // pred_region
        %s225 = ssub.s32 %s22, 1
        %s226 = sand.u32 %s58, 1
        %s227 = scalar_lea.sflag [#allocation3], %s226
        %s228 = sand.u32 %s58, 1
        %s229 = smul.addr %s228, 8
        %s230 = scalar_lea.vmem [#allocation2], %s229
        // Predicated region
        $region29: #{tpu_custom_call.1} parent=27 // pred_check
          %p231 = pneg %p71
        $region30: #{tpu_custom_call.1} parent=27 // pred_check_branch
          %233 = sbr.rel (%p231) target = $region32
        $region31: #{tpu_custom_call.1} parent=27 // pred_region
          %234 = dma.done %s227, 128
        $region32: #{tpu_custom_call.1} parent=27 // pred_fallthru
          _
        %s235 = sand.u32 %s88, 1
        %s236 = scalar_lea.sflag [#allocation6], %s235
        %s237 = sand.u32 %s88, 1
        %s238 = smul.addr %s237, 2
        %s239 = scalar_lea.vmem [#allocation5], %s238
        // Predicated region
        $region33: #{tpu_custom_call.1} parent=27 // pred_check
          %p240 = pneg %p101
        $region34: #{tpu_custom_call.1} parent=27 // pred_check_branch
          %242 = sbr.rel (%p240) target = $region36
        $region35: #{tpu_custom_call.1} parent=27 // pred_region
          %243 = dma.done %s236, 32
        $region36: #{tpu_custom_call.1} parent=27 // pred_fallthru
          _
        %s244 = sand.u32 %s58, 1
        %s245 = scalar_lea.sflag [#allocation3], %s244
        %s246 = sand.u32 %s58, 1
        %s247 = smul.addr %s246, 8
        %s248 = scalar_lea.vmem [#allocation2], %s247
        %p249 = pneg %p71
        %p250 = pneg %p68
        %s251 = sand.u32 %s88, 1
        %s252 = scalar_lea.sflag [#allocation6], %s251
        %s253 = sand.u32 %s88, 1
        %s254 = smul.addr %s253, 2
        %s255 = scalar_lea.vmem [#allocation5], %s254
        %p256 = pneg %p101
        %p257 = pneg %p98
        %p258 = pneg %p129
        %p259 = pneg %p126
        %s260 = sand.u32 %s116, 1
        %s261 = scalar_lea.sflag [#allocation4], %s260
        %s262 = sand.u32 %s116, 1
        %s263 = smul.addr %s262, 8
        %s264 = scalar_lea.vmem [#allocation7], %s263
        %p265 = pneg %p157
        %p266 = pneg %p154
        %s267 = sand.u32 %s144, 1
        %s268 = scalar_lea.sflag [#allocation9], %s267
        %s269 = sand.u32 %s144, 1
        %s270 = smul.addr %s269, 8
        %s271 = scalar_lea.vmem [#allocation8], %s270
        %s272 = sadd.s32 %s32, %s34
        %s273 = sadd.s32 %s32, %s34
        %p274 = scmp.eq.s32.totalorder %s34, 0
        // Predicated region
        $region37: #{tpu_custom_call.1} parent=27 // pred_check
          %p275 = pneg %p274
        $region38: #{tpu_custom_call.1} parent=27 // pred_check_branch
          %277 = sbr.rel (%p275) target = $region40
        $region39: #{tpu_custom_call.1} parent=27 // pred_region
          %278 = vst [vmem:[%s264] sm:$0x3] 0.0
          %279 = vst [vmem:[%s264 + $0x2] sm:$0x3] 0.0
          %280 = vst [vmem:[%s264 + $0x4] sm:$0x3] 0.0
          %281 = vst [vmem:[%s264 + $0x6] sm:$0x3] 0.0
          %282 = vst [vmem:[%s271] sm:$0x3] 0.0
          %283 = vst [vmem:[%s271 + $0x2] sm:$0x3] 0.0
          %284 = vst [vmem:[%s271 + $0x4] sm:$0x3] 0.0
          %285 = vst [vmem:[%s271 + $0x6] sm:$0x3] 0.0
        $region40: #{tpu_custom_call.1} parent=27 // pred_fallthru
          _
        %v286 = vld [vmem:[%s230] sm:$0x3]
        %s287 = scalar_lea.vmem %s230, 2 [#allocation2]
        %v288 = vld [vmem:[%s287] sm:$0x3]
        %s289 = scalar_lea.vmem %s230, 4 [#allocation2]
        %v290 = vld [vmem:[%s289] sm:$0x3]
        %s291 = scalar_lea.vmem %s230, 6 [#allocation2]
        %v292 = vld [vmem:[%s291] sm:$0x3]
        %v293 = vmax.f32 %v286, %v288
        %v294 = vmax.f32 %v293, %v290
        %v295 = vmax.f32 %v294, %v292
        %v296 = vsub.f32 %v286, %v295
        %v297 = vmul.f32 %v296, 1.442695
        %v298 = vpow.pop %v297
        %v299 = vsub.f32 %v288, %v295
        %v300 = vmul.f32 %v299, 1.442695
        %v301 = vpow.pop %v300
        %v302 = vsub.f32 %v290, %v295
        %v303 = vmul.f32 %v302, 1.442695
        %v304 = vpow.pop %v303
        %v305 = vsub.f32 %v292, %v295
        %v306 = vmul.f32 %v305, 1.442695
        %v307 = vpow.pop %v306
        %v308 = vadd.f32 %v298, %v301
        %v309 = vadd.f32 %v308, %v304
        %v310 = vadd.f32 %v309, %v307
        %v311 = vrcp.pop %v310
        %v312 = vld [vmem:[%s239] sm:$0x3]
        %v313 = vmul.f32 %v298, %v311
        %vm314 = vcmp.eq.s32.totalorder %v312, 0
        %v315 = vsel %vm314, %v313, 0.0
        %v316 = vsel %vm314, 1.0, 0.0
        %v317 = vadd.f32 %v313, %v316
        %v318 = vld [vmem:[%s264] sm:$0x3]
        %v319 = vadd.f32 %v318, %v315
        %320 = vst [vmem:[%s264] sm:$0x3] %v319
        %v321 = vld [vmem:[%s271] sm:$0x3]
        %v322 = vadd.f32 %v321, %v317
        %323 = vst [vmem:[%s271] sm:$0x3] %v322
        %v324 = vmul.f32 %v301, %v311
        %vm325 = vcmp.eq.s32.totalorder %v312, 1
        %v326 = vsel %vm325, %v324, 0.0
        %v327 = vsel %vm325, 1.0, 0.0
        %v328 = vadd.f32 %v324, %v327
        %s329 = scalar_lea.vmem %s264, 2 [#allocation7]
        %v330 = vld [vmem:[%s329] sm:$0x3]
        %v331 = vadd.f32 %v330, %v326
        %332 = vst [vmem:[%s329] sm:$0x3] %v331
        %s333 = scalar_lea.vmem %s271, 2 [#allocation8]
        %v334 = vld [vmem:[%s333] sm:$0x3]
        %v335 = vadd.f32 %v334, %v328
        %336 = vst [vmem:[%s333] sm:$0x3] %v335
        %v337 = vmul.f32 %v304, %v311
        %vm338 = vcmp.eq.s32.totalorder %v312, 2
        %v339 = vsel %vm338, %v337, 0.0
        %v340 = vsel %vm338, 1.0, 0.0
        %v341 = vadd.f32 %v337, %v340
        %s342 = scalar_lea.vmem %s264, 4 [#allocation7]
        %v343 = vld [vmem:[%s342] sm:$0x3]
        %v344 = vadd.f32 %v343, %v339
        %345 = vst [vmem:[%s342] sm:$0x3] %v344
        %s346 = scalar_lea.vmem %s271, 4 [#allocation8]
        %v347 = vld [vmem:[%s346] sm:$0x3]
        %v348 = vadd.f32 %v347, %v341
        %349 = vst [vmem:[%s346] sm:$0x3] %v348
        %v350 = vmul.f32 %v307, %v311
        %vm351 = vcmp.eq.s32.totalorder %v312, 3
        %v352 = vsel %vm351, %v350, 0.0
        %v353 = vsel %vm351, 1.0, 0.0
        %v354 = vadd.f32 %v350, %v353
        %s355 = scalar_lea.vmem %s264, 6 [#allocation7]
        %v356 = vld [vmem:[%s355] sm:$0x3]
        %v357 = vadd.f32 %v356, %v352
        %358 = vst [vmem:[%s355] sm:$0x3] %v357
        %s359 = scalar_lea.vmem %s271, 6 [#allocation8]
        %v360 = vld [vmem:[%s359] sm:$0x3]
        %v361 = vadd.f32 %v360, %v354
        %362 = vst [vmem:[%s359] sm:$0x3] %v361
        %s363 = sand.u32 %s116, 1
        %s364 = scalar_lea.sflag [#allocation4], %s363
        %s365 = sand.u32 %s116, 1
        %s366 = smul.addr %s365, 8
        %s367 = scalar_lea.vmem [#allocation7], %s366
        %s368 = sand.u32 %s144, 1
        %s369 = scalar_lea.sflag [#allocation9], %s368
        %s370 = sand.u32 %s144, 1
        %s371 = smul.addr %s370, 8
        %s372 = scalar_lea.vmem [#allocation8], %s371
        // Predicated region
        $region41: #{tpu_custom_call.1} parent=27 // pred_check
          %p373 = pneg %p126
        $region42: #{tpu_custom_call.1} parent=27 // pred_check_branch
          %375 = sbr.rel (%p373) target = $region44
        $region43: #{tpu_custom_call.1} parent=27 // pred_region
          %s377 = ssub.s32 128, 128
          %378 = vsyncadd %s364, %s377
          %s379 = smul.addr %s33, 4
          %s380 = smul.addr %s32, 8
          %s381 = sadd.s32 %s379, %s380
          %s382 = smul.addr %s381, 32
          %s383 = scalar_lea.hbm %s2, %s382
          %s384 = sshll.u32 %s367, 4
          %s385 = int_to_ptr.vmem [resolvable:$true] %s384
          %390 = dma.vmem_to_hbm [thread:$0]  %s385, 128, %s383, %s364, 32, 32, 2
        $region44: #{tpu_custom_call.1} parent=27 // pred_fallthru
          _
        // Predicated region
        $region45: #{tpu_custom_call.1} parent=27 // pred_check
          %p391 = pneg %p154
        $region46: #{tpu_custom_call.1} parent=27 // pred_check_branch
          %393 = sbr.rel (%p391) target = $region48
        $region47: #{tpu_custom_call.1} parent=27 // pred_region
          %s395 = ssub.s32 128, 128
          %396 = vsyncadd %s369, %s395
          %s397 = smul.addr %s33, 4
          %s398 = smul.addr %s32, 8
          %s399 = sadd.s32 %s397, %s398
          %s400 = smul.addr %s399, 32
          %s401 = scalar_lea.hbm %s3, %s400
          %s402 = sshll.u32 %s372, 4
          %s403 = int_to_ptr.vmem [resolvable:$true] %s402
          %408 = dma.vmem_to_hbm [thread:$0]  %s403, 128, %s401, %s369, 32, 32, 2
        $region48: #{tpu_custom_call.1} parent=27 // pred_fallthru
          _
      $region28: #{tpu_custom_call.1} parent=5 // pred_fallthru
        _
      %p409 = scmp.le.s32.totalorder 2, %s22
      // Predicated region
      $region49: #{tpu_custom_call.1} parent=5 // pred_check
        %p410 = pneg %p409
      $region50: #{tpu_custom_call.1} parent=5 // pred_check_branch
        %412 = sbr.rel (%p410) target = $region52
      $region51: #{tpu_custom_call.1} parent=5 // pred_region
        %s413 = ssub.s32 %s22, 2
        // Predicated region
        $region53: #{tpu_custom_call.1} parent=51 // pred_check
          %p414 = pneg %p132
        $region54: #{tpu_custom_call.1} parent=51 // pred_check_branch
          %416 = sbr.rel (%p414) target = $region56
        $region55: #{tpu_custom_call.1} parent=51 // pred_region
          %s417 = sand.u32 %s117, 1
          %s418 = scalar_lea.sflag [#allocation4], %s417
          %s419 = sand.u32 %s117, 1
          %s420 = smul.addr %s419, 8
          %s421 = scalar_lea.vmem [#allocation7], %s420
          %422 = dma.done %s418, 128
        $region56: #{tpu_custom_call.1} parent=51 // pred_fallthru
          _
        // Predicated region
        $region57: #{tpu_custom_call.1} parent=51 // pred_check
          %p423 = pneg %p160
        $region58: #{tpu_custom_call.1} parent=51 // pred_check_branch
          %425 = sbr.rel (%p423) target = $region60
        $region59: #{tpu_custom_call.1} parent=51 // pred_region
          %s426 = sand.u32 %s145, 1
          %s427 = scalar_lea.sflag [#allocation9], %s426
          %s428 = sand.u32 %s145, 1
          %s429 = smul.addr %s428, 8
          %s430 = scalar_lea.vmem [#allocation8], %s429
          %431 = dma.done %s427, 128
        $region60: #{tpu_custom_call.1} parent=51 // pred_fallthru
          _
      $region52: #{tpu_custom_call.1} parent=5 // pred_fallthru
        _
    $region6: #{tpu_custom_call.1} parent=1 // loop_footer
      %s26 = sadd.s32 1, %s22
    $region7: #{tpu_custom_call.1} parent=1 // loop_footer_branch
      %21 = sbr.rel target = $region3
    $region8: #{tpu_custom_call.1} parent=1 // loop_exit
      _
    %432 = vsyncpa [#allocation3], 1
    %s433 = scalar_lea.sflag [#allocation3], 1
    %434 = vsyncpa %s433, 1
    %435 = vsyncpa [#allocation6], 1
    %s436 = scalar_lea.sflag [#allocation6], 1
    %437 = vsyncpa %s436, 1
    %438 = vsyncpa [#allocation4], 1
    %s439 = scalar_lea.sflag [#allocation4], 1
    %440 = vsyncpa %s439, 1
    %441 = vsyncpa [#allocation9], 1
    %s442 = scalar_lea.sflag [#allocation9], 1
    %443 = vsyncpa %s442, 1

</llo_original>
